<compile_context>
chip_gen: v6e
topology: v6e:2x2x1
jax: 0.10.0
libtpu: 0.0.40
codegen_flags: <defaults>
</compile_context>

<pallas_src>
import functools
import math

import jax
import jax.numpy as jnp
from jax.experimental import pallas as pl
from jax.experimental.pallas import tpu as pltpu

_LANE = 128


def _build_pe_table(d_model: int, max_seq_len: int) -> jnp.ndarray:
    """Reproduces the exact (slightly non-standard) loop from the PyTorch code.

    pe[pos, i]   = sin(pos / 10000 ** (2 * i / d_model))        for even i
    pe[pos, i+1] = cos(pos / 10000 ** (2 * (i + 1) / d_model))
    """
    pos = jnp.arange(max_seq_len, dtype=jnp.float32)[:, None]          # (L, 1)
    i_even = jnp.arange(0, d_model, 2, dtype=jnp.float32)[None, :]     # (1, D/2)
    i_odd = i_even + 1.0                                               # (1, D/2)

    sin_part = jnp.sin(pos / jnp.power(10000.0, 2.0 * i_even / d_model))  # (L, D/2)
    cos_part = jnp.cos(pos / jnp.power(10000.0, 2.0 * i_odd / d_model))   # (L, D/2)

    pe = jnp.zeros((max_seq_len, d_model), dtype=jnp.float32)
    pe = pe.at[:, 0::2].set(sin_part)
    pe = pe.at[:, 1::2].set(cos_part)
    return pe


def _pe_add_kernel(x_ref, pe_ref, o_ref, *, scale):
    # All refs are (tile_rows, 128) (batch dim squeezed away where present):
    # one full-tile fused multiply-add, purely HBM-bandwidth-bound.
    o_ref[...] = x_ref[...] * scale + pe_ref[...]


def positional_encoder_forward(
    x: jnp.ndarray,
    pe: jnp.ndarray,
    d_model: int,
    *,
    tile_rows: int = 2048,
    vmem_limit_bytes: int | None = None,
) -> jnp.ndarray:
    """x: (B, S, D) float32, pe: (max_seq_len, D) float32 -> (B, S, D)."""
    B, S, D = x.shape
    L = pe.shape[0]
    assert D == d_model
    assert S <= L, f"seq_len {S} exceeds max_seq_len {L}"
    scale = float(math.sqrt(d_model))
    lane = _LANE

    # ---- lane-dense fold: pad S so each (S_pad, D) slab folds to (rows, 128) --
    unit = _LANE // math.gcd(D, _LANE)          # rows per 128-lane group
    S_pad = ((S + unit - 1) // unit) * unit
    rows_per_batch = (S_pad * D) // lane

    x_p = x if S_pad == S else jnp.pad(x, ((0, 0), (0, S_pad - S), (0, 0)))

    # pe slab for exactly the (padded) window, folded with the identical flat
    # (pos*D + i) layout as x, so the per-row add stays in lockstep.
    pe_slab = pe[: min(S_pad, L)]
    if S_pad > L:
        pe_slab = jnp.pad(pe_slab, ((0, S_pad - L), (0, 0)))
    pe2 = pe_slab.reshape(rows_per_batch, lane)

    kernel = functools.partial(_pe_add_kernel, scale=scale)
    total_rows = B * rows_per_batch
    bytes_f32 = 4

    def _unfold(out2):
        out = out2.reshape(B, S_pad, D)
        return out[:, :S, :] if S_pad != S else out

    # ---- tiny inputs: fold batch into rows (one lane-dense slab, 1 grid axis) --
    if rows_per_batch < 8 or total_rows <= 1024:
        x3 = x_p.reshape(total_rows, lane)
        pe3 = pe2 if B == 1 else jnp.tile(pe2, (B, 1))   # tiny, duplication is free
        tr = min(tile_rows, total_rows)
        if tr < total_rows:
            tr = max(8, (tr // 8) * 8)                   # (8, 128) tiling rule
        num_tiles = pl.cdiv(total_rows, tr)
        out3 = pl.pallas_call(
            kernel,
            out_shape=jax.ShapeDtypeStruct((total_rows, lane), x.dtype),
            grid_spec=pltpu.PrefetchScalarGridSpec(
                num_scalar_prefetch=0,
                grid=(num_tiles,),
                in_specs=[
                    pl.BlockSpec((tr, lane), lambda i: (i, 0)),
                    pl.BlockSpec((tr, lane), lambda i: (i, 0)),
                ],
                out_specs=pl.BlockSpec((tr, lane), lambda i: (i, 0)),
            ),
            compiler_params=pltpu.CompilerParams(
                dimension_semantics=("parallel",),
                vmem_limit_bytes=vmem_limit_bytes,
            ),
            cost_estimate=pl.CostEstimate(
                flops=2 * total_rows * lane,
                bytes_accessed=3 * total_rows * lane * bytes_f32,
                transcendentals=0,
            ),
        )(x3, pe3)
        return _unfold(out3.reshape(B, rows_per_batch, lane))

    # ---- general case: keep batch as its own (squeezed) dim -------------------
    x2 = x_p.reshape(B, rows_per_batch, lane)
    tr = min(tile_rows, rows_per_batch)
    if tr < rows_per_batch:
        tr = max(8, (tr // 8) * 8)                       # (8, 128) tiling rule
    num_row_tiles = pl.cdiv(rows_per_batch, tr)

    cost = pl.CostEstimate(
        flops=2 * B * rows_per_batch * lane,
        bytes_accessed=(2 * B * rows_per_batch + rows_per_batch) * lane * bytes_f32,
        transcendentals=0,
    )

    if num_row_tiles == 1:
        # Whole per-batch slab fits one tile: shard the batch axis ("parallel",
        # megacore gets >=2 steps when B>=2); the pe block index is constant so
        # pe is DMA'd once, not once per batch.
        out2 = pl.pallas_call(
            kernel,
            out_shape=jax.ShapeDtypeStruct((B, rows_per_batch, lane), x.dtype),
            grid_spec=pltpu.PrefetchScalarGridSpec(
                num_scalar_prefetch=0,
                grid=(B,),
                in_specs=[
                    pl.BlockSpec((pl.Squeezed(), rows_per_batch, lane),
                                 lambda b: (b, 0, 0)),
                    pl.BlockSpec((rows_per_batch, lane), lambda b: (0, 0)),
                ],
                out_specs=pl.BlockSpec((pl.Squeezed(), rows_per_batch, lane),
                                       lambda b: (b, 0, 0)),
            ),
            compiler_params=pltpu.CompilerParams(
                dimension_semantics=("parallel",),
                vmem_limit_bytes=vmem_limit_bytes,
            ),
            cost_estimate=cost,
        )(x2, pe2)
    else:
        # Row tiles outermost ("parallel"), batch innermost ("arbitrary"):
        # consecutive steps keep the same pe block index, so the pe tile is
        # DMA'd once per row tile instead of once per (row tile, batch).
        out2 = pl.pallas_call(
            kernel,
            out_shape=jax.ShapeDtypeStruct((B, rows_per_batch, lane), x.dtype),
            grid_spec=pltpu.PrefetchScalarGridSpec(
                num_scalar_prefetch=0,
                grid=(num_row_tiles, B),
                in_specs=[
                    pl.BlockSpec((pl.Squeezed(), tr, lane), lambda s, b: (b, s, 0)),
                    pl.BlockSpec((tr, lane), lambda s, b: (s, 0)),
                ],
                out_specs=pl.BlockSpec((pl.Squeezed(), tr, lane),
                                       lambda s, b: (b, s, 0)),
            ),
            compiler_params=pltpu.CompilerParams(
                dimension_semantics=("parallel", "arbitrary"),
                vmem_limit_bytes=vmem_limit_bytes,
            ),
            cost_estimate=cost,
        )(x2, pe2)

    return _unfold(out2)


if __name__ == "__main__":
    d_model = 32
    max_seq_len = 900       # module default
    B = 2

    key = jax.random.PRNGKey(0)
    k1, k2, k3 = jax.random.split(key, 3)

    pe = _build_pe_table(d_model, max_seq_len)
    scale = math.sqrt(d_model)

    # --- test 1: tiny lane-dense input (batch-folded path) --------------------
    S = 8
    x = jax.random.normal(k1, (B, S, d_model), dtype=jnp.float32)
    out = jax.block_until_ready(positional_encoder_forward(x, pe, d_model))
    ref = x * scale + pe[None, :S, :]
    assert out.shape == (B, S, d_model)
    assert jnp.allclose(out, ref, atol=1e-5, rtol=1e-5)

    # --- test 2: S*D not a multiple of 128 -> padded lane-dense path ----------
    S2 = 7
    x_b = jax.random.normal(k2, (B, S2, d_model), dtype=jnp.float32)
    out_b = jax.block_until_ready(positional_encoder_forward(x_b, pe, d_model))
    ref_b = x_b * scale + pe[None, :S2, :]
    assert out_b.shape == (B, S2, d_model)
    assert jnp.allclose(out_b, ref_b, atol=1e-5, rtol=1e-5)

    # --- test 3: larger input, grid=(B,) path (pe resident, batch-parallel) ---
    B3, S3 = 8, max_seq_len
    x_c = jax.random.normal(k3, (B3, S3, d_model), dtype=jnp.float32)
    out_c = jax.block_until_ready(positional_encoder_forward(x_c, pe, d_model))
    ref_c = x_c * scale + pe[None, :S3, :]
    assert jnp.allclose(out_c, ref_c, atol=1e-5, rtol=1e-5)

    # --- test 4: force the (num_row_tiles, B) two-axis grid (partial tiles) ---
    out_d = jax.block_until_ready(
        positional_encoder_forward(x_c, pe, d_model, tile_rows=64))
    assert jnp.allclose(out_d, ref_c, atol=1e-5, rtol=1e-5)

    print("KERNEL_OK")
</pallas_src>

<mosaic_0001>
module attributes {stable_mosaic.version = 11 : i64} {
  func.func @_pe_add_kernel(%arg0: i32, %arg1: memref<4x128xf32, #tpu.memory_space<vmem>>, %arg2: memref<4x128xf32, #tpu.memory_space<vmem>>, %arg3: memref<4x128xf32, #tpu.memory_space<vmem>>) attributes {dimension_semantics = [#tpu.dimension_semantics<parallel>], iteration_bounds = array<i64: 1>, scalar_prefetch = 0 : i64, scratch_operands = 0 : i64, tpu.core_type = #tpu.core_type<tc>, window_params = [{transform_indices = @transform_0, window_bounds = array<i64: 4, 128>}, {transform_indices = @transform_1, window_bounds = array<i64: 4, 128>}, {transform_indices = @transform_2, window_bounds = array<i64: 4, 128>}]} {
    %c0 = arith.constant 0 : index
    %c0_0 = arith.constant 0 : index
    %0 = vector.load %arg1[%c0, %c0_0] : memref<4x128xf32, #tpu.memory_space<vmem>>, vector<4x128xf32>
    %cst = arith.constant 5.65685415 : f32
    %1 = vector.broadcast %cst : f32 to vector<4x128xf32>
    %2 = arith.mulf %0, %1 : vector<4x128xf32>
    %c0_1 = arith.constant 0 : index
    %c0_2 = arith.constant 0 : index
    %3 = vector.load %arg2[%c0_1, %c0_2] : memref<4x128xf32, #tpu.memory_space<vmem>>, vector<4x128xf32>
    %4 = arith.addf %2, %3 : vector<4x128xf32>
    %c0_3 = arith.constant 0 : index
    %c0_4 = arith.constant 0 : index
    %5 = vector.load %arg3[%c0_3, %c0_4] : memref<4x128xf32, #tpu.memory_space<vmem>>, vector<4x128xf32>
    tpu.vector_store %arg3[%c0_3, %c0_4], %4 {strides = array<i32>} : memref<4x128xf32, #tpu.memory_space<vmem>>, vector<4x128xf32>,
    return
  }
  func.func @transform_0(%arg0: i32) -> (i32, i32) {
    %c0_i32 = arith.constant 0 : i32
    %c0_i32_0 = arith.constant 0 : i32
    return %arg0, %c0_i32 : i32, i32
  }
  func.func @transform_1(%arg0: i32) -> (i32, i32) {
    %c0_i32 = arith.constant 0 : i32
    %c0_i32_0 = arith.constant 0 : i32
    return %arg0, %c0_i32 : i32, i32
  }
  func.func @transform_2(%arg0: i32) -> (i32, i32) {
    %c0_i32 = arith.constant 0 : i32
    %c0_i32_0 = arith.constant 0 : i32
    return %arg0, %c0_i32 : i32, i32
  }
}

</mosaic_0001>

<llo_original>
// kernel: tpu_custom_call.1
$region0: #{tpu_custom_call.1}
  #allocation0 [shape = 'u32[]', space=smem, size = 0x4, offset = 0x4, fixed_abs, tag = 'smem constant byte address 0x4 - core index']
  #allocation1 [shape = 'u32[144,128]{1,0:T(1,128)}', space=vmem, size = 0x12000, scoped, tag = 'internal scratch']
  %s0 = inlined_call_operand.hbm [shape: f32[4,128], index: 0, kind: input, shape index: {}]
  %s1 = inlined_call_operand.hbm [shape: f32[4,128], index: 1, kind: input, shape index: {}]
  %s2 = inlined_call_operand.hbm [shape: f32[4,128], index: 2, kind: output, shape index: {}]
  %s3 = sld [smem:[#allocation0]]
  $region26: #{tpu_custom_call.1} parent=0
    _
  %s5 = ssub.s32 1, %s3
  %s6 = scalar_select 0, %s5, %s3
  $region1: #{tpu_custom_call.1} parent=0
    #allocation2 [shape = 'u8[2048]{0}', space=vmem, size = 0x800, scoped, tag = 'input window, operand 0, single buffered']
    #allocation3 [shape = 's32[1]{0}', space=sflag, size = 0x4, scoped, tag = 'scoped memory for tpu_custom_call.1']
    #allocation4 [shape = 's32[1]{0}', space=sflag, size = 0x4, scoped, tag = 'scoped memory for tpu_custom_call.1']
    #allocation5 [shape = 'u8[2048]{0}', space=vmem, size = 0x800, scoped, tag = 'input window, operand 1, single buffered']
    #allocation6 [shape = 's32[1]{0}', space=sflag, size = 0x4, scoped, tag = 'scoped memory for tpu_custom_call.1']
    #allocation7 [shape = 'u8[2048]{0}', space=vmem, size = 0x800, scoped, tag = 'output window, operand 0, single buffered']
    %7 = vsyncpa [#allocation3], 0
    %8 = vsyncpa [#allocation6], 0
    %9 = vsyncpa [#allocation4], 0
    // Predicated region
    $region2: #{tpu_custom_call.1} parent=1 // pred_check
      _
    $region3: #{tpu_custom_call.1} parent=1 // pred_check_branch
      %11 = sbr.rel (0) target = $region5
    $region4: #{tpu_custom_call.1} parent=1 // pred_region
      %s13 = ssub.s32 64, 64
      %14 = vsyncadd [#allocation3], %s13
      %s16 = sshll.u32 [#allocation2], 4
      %s17 = int_to_ptr.vmem [resolvable:$true] %s16
      %19 = dma.hbm_to_vmem [thread:$0]  %s0, 64, %s17, [#allocation3]
    $region5: #{tpu_custom_call.1} parent=1 // pred_fallthru
      _
    // Predicated region
    $region6: #{tpu_custom_call.1} parent=1 // pred_check
      _
    $region7: #{tpu_custom_call.1} parent=1 // pred_check_branch
      %21 = sbr.rel (0) target = $region9
    $region8: #{tpu_custom_call.1} parent=1 // pred_region
      %s23 = ssub.s32 64, 64
      %24 = vsyncadd [#allocation6], %s23
      %s26 = sshll.u32 [#allocation5], 4
      %s27 = int_to_ptr.vmem [resolvable:$true] %s26
      %29 = dma.hbm_to_vmem [thread:$0]  %s1, 64, %s27, [#allocation6]
    $region9: #{tpu_custom_call.1} parent=1 // pred_fallthru
      _
    // Predicated region
    $region10: #{tpu_custom_call.1} parent=1 // pred_check
      _
    $region11: #{tpu_custom_call.1} parent=1 // pred_check_branch
      %31 = sbr.rel (0) target = $region13
    $region12: #{tpu_custom_call.1} parent=1 // pred_region
      %32 = dma.done [#allocation3], 64
    $region13: #{tpu_custom_call.1} parent=1 // pred_fallthru
      _
    // Predicated region
    $region14: #{tpu_custom_call.1} parent=1 // pred_check
      _
    $region15: #{tpu_custom_call.1} parent=1 // pred_check_branch
      %34 = sbr.rel (0) target = $region17
    $region16: #{tpu_custom_call.1} parent=1 // pred_region
      %35 = dma.done [#allocation6], 64
    $region17: #{tpu_custom_call.1} parent=1 // pred_fallthru
      _
    %v36 = vld [vmem:[#allocation2] sm:$0xf]
    %v37 = vmul.f32 %v36, 5.656854
    %v38 = vld [vmem:[#allocation5] sm:$0xf]
    %v39 = vadd.f32 %v37, %v38
    %40 = vst [vmem:[#allocation7] sm:$0xf] %v39
    // Predicated region
    $region18: #{tpu_custom_call.1} parent=1 // pred_check
      _
    $region19: #{tpu_custom_call.1} parent=1 // pred_check_branch
      %42 = sbr.rel (0) target = $region21
    $region20: #{tpu_custom_call.1} parent=1 // pred_region
      %s44 = ssub.s32 64, 64
      %45 = vsyncadd [#allocation4], %s44
      %s47 = sshll.u32 [#allocation7], 4
      %s48 = int_to_ptr.vmem [resolvable:$true] %s47
      %50 = dma.vmem_to_hbm [thread:$0]  %s48, 64, %s2, [#allocation4]
    $region21: #{tpu_custom_call.1} parent=1 // pred_fallthru
      _
    // Predicated region
    $region22: #{tpu_custom_call.1} parent=1 // pred_check
      _
    $region23: #{tpu_custom_call.1} parent=1 // pred_check_branch
      %52 = sbr.rel (0) target = $region25
    $region24: #{tpu_custom_call.1} parent=1 // pred_region
      %53 = dma.done [#allocation4], 64
    $region25: #{tpu_custom_call.1} parent=1 // pred_fallthru
      _
    %54 = vsyncpa [#allocation3], 1
    %55 = vsyncpa [#allocation6], 1
    %56 = vsyncpa [#allocation4], 1

</llo_original>
